<compile_context>
chip_gen: v5e
topology: v5e:2x2
jax: 0.10.0
libtpu: 0.0.40
codegen_flags: <defaults>
</compile_context>

<pallas_src>
import jax
import jax.numpy as jnp
from jax.experimental import pallas as pl
from jax.experimental.pallas import tpu as pltpu


def _round_up(x, m):
    return (x + m - 1) // m * m


def _linear_kernel(x_ref, w_ref, b_ref, o_ref):
    # x_ref: (TM, K) f32   w_ref: (K, Npad) bf16   b_ref: (1, Npad) f32
    # o_ref: (TM, Npad) f32
    x_bf = x_ref[...].astype(jnp.bfloat16)          # VPU cast, hidden under MXU
    acc = jnp.dot(x_bf, w_ref[...], preferred_element_type=jnp.float32)
    o_ref[...] = acc + b_ref[...]


def _pick_tm(batch, tm_max):
    """Batch-tile size: 8-aligned, <= tm_max, >=2 grid steps when possible."""
    if batch < 8:
        return batch                        # block == full dim (legal, single step)
    # Aim for at least two grid iterations so v7x megacore can shard rows.
    tm = _round_up(pl.cdiv(batch, 2), 8)
    return min(tm, tm_max)


def classifier_forward(x, weight, bias, *, tm_max=1024):
    """y = flatten(x) @ weight.T + bias  (PyTorch nn.Linear convention).

    x:      (B, C, H, W) float32 with C*H*W == weight.shape[1]
    weight: (N, K)  bias: (N,)
    returns (B, N) float32
    """
    B = x.shape[0]
    x_flat = x.reshape(B, -1)                       # x.view(x.size(0), -1); free reshape
    K = x_flat.shape[1]
    N = weight.shape[0]
    assert weight.shape[1] == K, "in_features mismatch"

    # --- weight/bias: pad N to one lane-dense tile (128) and pre-transpose ---
    Npad = _round_up(N, 128)
    w_t = jnp.pad(weight, ((0, Npad - N), (0, 0))).T.astype(jnp.bfloat16)  # (K, Npad)
    b2d = jnp.pad(bias, (0, Npad - N)).reshape(1, Npad).astype(jnp.float32)

    # --- batch tiling: no wrapper-side pad; ragged last block handled by Pallas ---
    tm = _pick_tm(B, tm_max)
    grid = (pl.cdiv(B, tm),)

    cost = pl.CostEstimate(
        flops=2 * B * K * Npad,
        transcendentals=0,
        bytes_accessed=B * K * 4 + K * Npad * 2 + Npad * 4 + B * Npad * 4,
    )

    out = pl.pallas_call(
        _linear_kernel,
        out_shape=jax.ShapeDtypeStruct((B, Npad), jnp.float32),
        grid=grid,
        in_specs=[
            pl.BlockSpec((tm, K), lambda i: (i, 0)),      # activations: tiled, f32
            pl.BlockSpec((K, Npad), lambda i: (0, 0)),    # weight: resident, bf16
            pl.BlockSpec((1, Npad), lambda i: (0, 0)),    # bias: resident, f32
        ],
        out_specs=pl.BlockSpec((tm, Npad), lambda i: (i, 0)),
        compiler_params=pltpu.CompilerParams(
            dimension_semantics=("parallel",)),
        cost_estimate=cost,
    )(x_flat, w_t, b2d)

    return out[:, :N]


if __name__ == "__main__":
    # resnet18 feature width is 512; pick C=2, H=W=16 so C*H*W == 512.
    B, C, H, W = 2, 2, 16, 16
    num_classes = 10
    in_features = C * H * W  # 512

    key = jax.random.PRNGKey(0)
    kx, kw, kb, kx2 = jax.random.split(key, 4)

    x = jax.random.normal(kx, (B, C, H, W), dtype=jnp.float32)
    weight = jax.random.normal(kw, (num_classes, in_features), dtype=jnp.float32) * 0.02
    bias = jax.random.normal(kb, (num_classes,), dtype=jnp.float32) * 0.02

    out = classifier_forward(x, weight, bias)
    out = jax.block_until_ready(out)

    # Full-precision reference (PyTorch f32 nn.Linear semantics); the bf16-MXU
    # result must stay within a documented tolerance of the f32 ground truth.
    ref = x.reshape(B, -1) @ weight.T + bias
    assert out.shape == (B, num_classes)
    assert jnp.allclose(out, ref, atol=2e-2, rtol=2e-2)

    # Second call with a ragged batch (B=20, tm=16 -> 2 grid steps, partial
    # last block) to exercise the multi-step / ragged-edge path.
    x2 = jax.random.normal(kx2, (20, C, H, W), dtype=jnp.float32)
    out2 = jax.block_until_ready(classifier_forward(x2, weight, bias))
    ref2 = x2.reshape(20, -1) @ weight.T + bias
    assert out2.shape == (20, num_classes)
    assert jnp.allclose(out2, ref2, atol=2e-2, rtol=2e-2)

    print("KERNEL_OK")
</pallas_src>

<mosaic_0001>
module attributes {stable_mosaic.version = 11 : i64} {
  func.func @_linear_kernel(%arg0: i32, %arg1: memref<2x512xf32, #tpu.memory_space<vmem>>, %arg2: memref<512x128xbf16, #tpu.memory_space<vmem>>, %arg3: memref<1x128xf32, #tpu.memory_space<vmem>>, %arg4: memref<2x128xf32, #tpu.memory_space<vmem>>) attributes {dimension_semantics = [#tpu.dimension_semantics<parallel>], iteration_bounds = array<i64: 1>, scalar_prefetch = 0 : i64, scratch_operands = 0 : i64, tpu.core_type = #tpu.core_type<tc>, window_params = [{transform_indices = @transform_0, window_bounds = array<i64: 2, 512>}, {pipeline_mode = #tpu.pipeline_mode<synchronous>, transform_indices = @transform_1, window_bounds = array<i64: 512, 128>}, {pipeline_mode = #tpu.pipeline_mode<synchronous>, transform_indices = @transform_2, window_bounds = array<i64: 1, 128>}, {transform_indices = @transform_3, window_bounds = array<i64: 2, 128>}]} {
    %c0 = arith.constant 0 : index
    %c0_0 = arith.constant 0 : index
    %0 = vector.load %arg1[%c0, %c0_0] : memref<2x512xf32, #tpu.memory_space<vmem>>, vector<2x512xf32>
    %1 = arith.truncf %0 : vector<2x512xf32> to vector<2x512xbf16>
    %c0_1 = arith.constant 0 : index
    %c0_2 = arith.constant 0 : index
    %2 = vector.load %arg2[%c0_1, %c0_2] : memref<512x128xbf16, #tpu.memory_space<vmem>>, vector<512x128xbf16>
    %cst = arith.constant dense<0.000000e+00> : vector<2x128xf32>
    %3 = tpu.matmul %1, %2, %cst {dimension_numbers = #tpu.dot_dimension_numbers<[1], [0], [0], [1], [0, 0, 1, 1], [], []>} : vector<2x512xbf16>, vector<512x128xbf16>, vector<2x128xf32> -> vector<2x128xf32>
    %c0_3 = arith.constant 0 : index
    %c0_4 = arith.constant 0 : index
    %4 = vector.load %arg3[%c0_3, %c0_4] : memref<1x128xf32, #tpu.memory_space<vmem>>, vector<1x128xf32>
    %5 = vector.broadcast %4 : vector<1x128xf32> to vector<2x128xf32>
    %6 = arith.addf %3, %5 : vector<2x128xf32>
    %c0_5 = arith.constant 0 : index
    %c0_6 = arith.constant 0 : index
    %7 = vector.load %arg4[%c0_5, %c0_6] : memref<2x128xf32, #tpu.memory_space<vmem>>, vector<2x128xf32>
    tpu.vector_store %arg4[%c0_5, %c0_6], %6 {strides = array<i32>} : memref<2x128xf32, #tpu.memory_space<vmem>>, vector<2x128xf32>,
    return
  }
  func.func @transform_0(%arg0: i32) -> (i32, i32) {
    %c0_i32 = arith.constant 0 : i32
    %c0_i32_0 = arith.constant 0 : i32
    return %arg0, %c0_i32 : i32, i32
  }
  func.func @transform_1(%arg0: i32) -> (i32, i32) {
    %c0_i32 = arith.constant 0 : i32
    %c0_i32_0 = arith.constant 0 : i32
    %c0_i32_1 = arith.constant 0 : i32
    return %c0_i32, %c0_i32_0 : i32, i32
  }
  func.func @transform_2(%arg0: i32) -> (i32, i32) {
    %c0_i32 = arith.constant 0 : i32
    %c0_i32_0 = arith.constant 0 : i32
    %c0_i32_1 = arith.constant 0 : i32
    return %c0_i32, %c0_i32_0 : i32, i32
  }
  func.func @transform_3(%arg0: i32) -> (i32, i32) {
    %c0_i32 = arith.constant 0 : i32
    %c0_i32_0 = arith.constant 0 : i32
    return %arg0, %c0_i32 : i32, i32
  }
}

</mosaic_0001>

<llo_original>
// kernel: tpu_custom_call.1
$region0: #{tpu_custom_call.1}
  #allocation0 [shape = 'u32[]', space=smem, size = 0x4, offset = 0x4, fixed_abs, tag = 'smem constant byte address 0x4 - core index']
  #allocation1 [shape = 'u32[72,128]{1,0:T(1,128)}', space=vmem, size = 0x9000, scoped, tag = 'internal scratch']
  %s0 = inlined_call_operand.hbm [shape: f32[2,512], index: 0, kind: input, shape index: {}]
  %s1 = inlined_call_operand.hbm [shape: bf16[512,128], index: 1, kind: input, shape index: {}]
  %s2 = inlined_call_operand.vmem [shape: f32[1,128], index: 2, kind: input, shape index: {}]
  %s3 = inlined_call_operand.hbm [shape: f32[2,128], index: 3, kind: output, shape index: {}]
  %s4 = sld [smem:[#allocation0]]
  $region30: #{tpu_custom_call.1} parent=0
    _
  %s6 = ssub.s32 1, %s4
  %s7 = scalar_select 0, %s6, %s4
  $region1: #{tpu_custom_call.1} parent=0
    #allocation2 [shape = 'u8[4096]{0}', space=vmem, size = 0x1000, scoped, tag = 'input window, operand 0, single buffered']
    #allocation3 [shape = 's32[1]{0}', space=sflag, size = 0x4, scoped, tag = 'scoped memory for tpu_custom_call.1']
    #allocation4 [shape = 's32[1]{0}', space=sflag, size = 0x4, scoped, tag = 'scoped memory for tpu_custom_call.1']
    #allocation5 [shape = 'u8[131072]{0}', space=vmem, size = 0x20000, scoped, tag = 'input window, operand 1, single buffered']
    #allocation6 [shape = 's32[1]{0}', space=sflag, size = 0x4, scoped, tag = 'scoped memory for tpu_custom_call.1']
    #allocation7 [shape = 'u8[1024]{0}', space=vmem, size = 0x400, scoped, tag = 'output window, operand 0, single buffered']
    %8 = vsyncpa [#allocation3], 0
    %9 = vsyncpa [#allocation6], 0
    %10 = vsyncpa [#allocation4], 0
    // Predicated region
    $region2: #{tpu_custom_call.1} parent=1 // pred_check
      _
    $region3: #{tpu_custom_call.1} parent=1 // pred_check_branch
      %12 = sbr.rel (0) target = $region5
    $region4: #{tpu_custom_call.1} parent=1 // pred_region
      %14 = vsyncadd [#allocation3], 0
      %s16 = sshll.u32 %s0, 4
      %s17 = int_to_ptr.hbm [resolvable:$true] %s16
      %s18 = sshll.u32 [#allocation2], 4
      %s19 = int_to_ptr.vmem [resolvable:$true] %s18
      %21 = dma.hbm_to_vmem [thread:$0]  %s17, 128, %s19, [#allocation3]
    $region5: #{tpu_custom_call.1} parent=1 // pred_fallthru
      _
    // Predicated region
    $region6: #{tpu_custom_call.1} parent=1 // pred_check
      _
    $region7: #{tpu_custom_call.1} parent=1 // pred_check_branch
      %23 = sbr.rel (0) target = $region9
    $region8: #{tpu_custom_call.1} parent=1 // pred_region
      %25 = vsyncadd [#allocation6], 0
      %s26 = sshll.u32 %s1, 4
      %s27 = int_to_ptr.hbm [resolvable:$true] %s26
      %s28 = sshll.u32 [#allocation5], 4
      %s29 = int_to_ptr.vmem [resolvable:$true] %s28
      %34 = dma.hbm_to_vmem [thread:$0]  %s27, 4096, %s29, [#allocation6], 64, 64, 4
    $region9: #{tpu_custom_call.1} parent=1 // pred_fallthru
      _
    // Predicated region
    $region10: #{tpu_custom_call.1} parent=1 // pred_check
      _
    $region11: #{tpu_custom_call.1} parent=1 // pred_check_branch
      %36 = sbr.rel (0) target = $region13
    $region12: #{tpu_custom_call.1} parent=1 // pred_region
      _
    $region13: #{tpu_custom_call.1} parent=1 // pred_fallthru
      _
    // Predicated region
    $region14: #{tpu_custom_call.1} parent=1 // pred_check
      _
    $region15: #{tpu_custom_call.1} parent=1 // pred_check_branch
      %38 = sbr.rel (0) target = $region17
    $region16: #{tpu_custom_call.1} parent=1 // pred_region
      %40 = dma.done [#allocation3], 128
    $region17: #{tpu_custom_call.1} parent=1 // pred_fallthru
      _
    // Predicated region
    $region18: #{tpu_custom_call.1} parent=1 // pred_check
      _
    $region19: #{tpu_custom_call.1} parent=1 // pred_check_branch
      %42 = sbr.rel (0) target = $region21
    $region20: #{tpu_custom_call.1} parent=1 // pred_region
      %44 = dma.done [#allocation6], 4096
    $region21: #{tpu_custom_call.1} parent=1 // pred_fallthru
      _
    %v45 = vld [vmem:[#allocation2] sm:$0xff]
    %47 = vst [vmem:[#allocation1] ss:$4 sm:$0xff] %v45
    %v48 = vld.sshfl [vmem:[#allocation1] sm:$0xff pattern:$0x73625140]
    %v49 = vld.sshfl [vmem:[#allocation1 + $0x8] sm:$0xff pattern:$0x73625140]
    %v50 = vld.sshfl [vmem:[#allocation1 + $0x10] sm:$0xff pattern:$0x73625140]
    %v51 = vld.sshfl [vmem:[#allocation1 + $0x18] sm:$0xff pattern:$0x73625140]
    %v56 = vpack.c.bf16 %v48, %v48
    %v57 = vpack.c.bf16 %v49, %v49
    %v58 = vpack.c.bf16 %v50, %v50
    %v59 = vpack.c.bf16 %v51, %v51
    %v60 = vld [vmem:[#allocation5] sm:$0xf]
    %v61 = vld [vmem:[#allocation5 + $0x4] sm:$0xf]
    %v62 = vld [vmem:[#allocation5 + $0x8] sm:$0xf]
    %v63 = vld [vmem:[#allocation5 + $0xc] sm:$0xf]
    %v64 = vld [vmem:[#allocation5 + $0x10] sm:$0xf]
    %v65 = vld [vmem:[#allocation5 + $0x14] sm:$0xf]
    %v66 = vld [vmem:[#allocation5 + $0x18] sm:$0xf]
    %v67 = vld [vmem:[#allocation5 + $0x1c] sm:$0xf]
    %v68 = vld [vmem:[#allocation5 + $0x20] sm:$0xf]
    %v69 = vld [vmem:[#allocation5 + $0x24] sm:$0xf]
    %v70 = vld [vmem:[#allocation5 + $0x28] sm:$0xf]
    %v71 = vld [vmem:[#allocation5 + $0x2c] sm:$0xf]
    %v72 = vld [vmem:[#allocation5 + $0x30] sm:$0xf]
    %v73 = vld [vmem:[#allocation5 + $0x34] sm:$0xf]
    %v74 = vld [vmem:[#allocation5 + $0x38] sm:$0xf]
    %v75 = vld [vmem:[#allocation5 + $0x3c] sm:$0xf]
    %v76 = vld [vmem:[#allocation5 + $0x40] sm:$0xf]
    %v77 = vld [vmem:[#allocation5 + $0x44] sm:$0xf]
    %v78 = vld [vmem:[#allocation5 + $0x48] sm:$0xf]
    %v79 = vld [vmem:[#allocation5 + $0x4c] sm:$0xf]
    %v80 = vld [vmem:[#allocation5 + $0x50] sm:$0xf]
    %v81 = vld [vmem:[#allocation5 + $0x54] sm:$0xf]
    %v82 = vld [vmem:[#allocation5 + $0x58] sm:$0xf]
    %v83 = vld [vmem:[#allocation5 + $0x5c] sm:$0xf]
    %v84 = vld [vmem:[#allocation5 + $0x60] sm:$0xf]
    %v85 = vld [vmem:[#allocation5 + $0x64] sm:$0xf]
    %v86 = vld [vmem:[#allocation5 + $0x68] sm:$0xf]
    %v87 = vld [vmem:[#allocation5 + $0x6c] sm:$0xf]
    %v88 = vld [vmem:[#allocation5 + $0x70] sm:$0xf]
    %v89 = vld [vmem:[#allocation5 + $0x74] sm:$0xf]
    %v90 = vld [vmem:[#allocation5 + $0x78] sm:$0xf]
    %v91 = vld [vmem:[#allocation5 + $0x7c] sm:$0xf]
    %v92 = vld [vmem:[#allocation5 + $0x80] sm:$0xf]
    %v93 = vld [vmem:[#allocation5 + $0x84] sm:$0xf]
    %v94 = vld [vmem:[#allocation5 + $0x88] sm:$0xf]
    %v95 = vld [vmem:[#allocation5 + $0x8c] sm:$0xf]
    %v96 = vld [vmem:[#allocation5 + $0x90] sm:$0xf]
    %v97 = vld [vmem:[#allocation5 + $0x94] sm:$0xf]
    %v98 = vld [vmem:[#allocation5 + $0x98] sm:$0xf]
    %v99 = vld [vmem:[#allocation5 + $0x9c] sm:$0xf]
    %v100 = vld [vmem:[#allocation5 + $0xa0] sm:$0xf]
    %v101 = vld [vmem:[#allocation5 + $0xa4] sm:$0xf]
    %v102 = vld [vmem:[#allocation5 + $0xa8] sm:$0xf]
    %v103 = vld [vmem:[#allocation5 + $0xac] sm:$0xf]
    %v104 = vld [vmem:[#allocation5 + $0xb0] sm:$0xf]
    %v105 = vld [vmem:[#allocation5 + $0xb4] sm:$0xf]
    %v106 = vld [vmem:[#allocation5 + $0xb8] sm:$0xf]
    %v107 = vld [vmem:[#allocation5 + $0xbc] sm:$0xf]
    %v108 = vld [vmem:[#allocation5 + $0xc0] sm:$0xf]
    %v109 = vld [vmem:[#allocation5 + $0xc4] sm:$0xf]
    %v110 = vld [vmem:[#allocation5 + $0xc8] sm:$0xf]
    %v111 = vld [vmem:[#allocation5 + $0xcc] sm:$0xf]
    %v112 = vld [vmem:[#allocation5 + $0xd0] sm:$0xf]
    %v113 = vld [vmem:[#allocation5 + $0xd4] sm:$0xf]
    %v114 = vld [vmem:[#allocation5 + $0xd8] sm:$0xf]
    %v115 = vld [vmem:[#allocation5 + $0xdc] sm:$0xf]
    %v116 = vld [vmem:[#allocation5 + $0xe0] sm:$0xf]
    %v117 = vld [vmem:[#allocation5 + $0xe4] sm:$0xf]
    %v118 = vld [vmem:[#allocation5 + $0xe8] sm:$0xf]
    %v119 = vld [vmem:[#allocation5 + $0xec] sm:$0xf]
    %v120 = vld [vmem:[#allocation5 + $0xf0] sm:$0xf]
    %v121 = vld [vmem:[#allocation5 + $0xf4] sm:$0xf]
    %v122 = vld [vmem:[#allocation5 + $0xf8] sm:$0xf]
    %v123 = vld [vmem:[#allocation5 + $0xfc] sm:$0xf]
    %v124 = vld [vmem:[%s2] sm:$0x1]
    %v126 = vperm.slane %v124, 0
    %v192 = vunpack.c.l.b16 %v60
    %v193 = vunpack.c.l.b16 %v61
    %v194 = vunpack.c.l.b16 %v62
    %v195 = vunpack.c.l.b16 %v63
    %v196 = vunpack.c.l.b16 %v64
    %v197 = vunpack.c.l.b16 %v65
    %v198 = vunpack.c.l.b16 %v66
    %v199 = vunpack.c.l.b16 %v67
    %v200 = vunpack.c.l.b16 %v68
    %v201 = vunpack.c.l.b16 %v69
    %v202 = vunpack.c.l.b16 %v70
    %v203 = vunpack.c.l.b16 %v71
    %v204 = vunpack.c.l.b16 %v72
    %v205 = vunpack.c.l.b16 %v73
    %v206 = vunpack.c.l.b16 %v74
    %v207 = vunpack.c.l.b16 %v75
    %v208 = vunpack.c.l.b16 %v76
    %v209 = vunpack.c.l.b16 %v77
    %v210 = vunpack.c.l.b16 %v78
    %v211 = vunpack.c.l.b16 %v79
    %v212 = vunpack.c.l.b16 %v80
    %v213 = vunpack.c.l.b16 %v81
    %v214 = vunpack.c.l.b16 %v82
    %v215 = vunpack.c.l.b16 %v83
    %v216 = vunpack.c.l.b16 %v84
    %v217 = vunpack.c.l.b16 %v85
    %v218 = vunpack.c.l.b16 %v86
    %v219 = vunpack.c.l.b16 %v87
    %v220 = vunpack.c.l.b16 %v88
    %v221 = vunpack.c.l.b16 %v89
    %v222 = vunpack.c.l.b16 %v90
    %v223 = vunpack.c.l.b16 %v91
    %v224 = vunpack.c.l.b16 %v92
    %v225 = vunpack.c.l.b16 %v93
    %v226 = vunpack.c.l.b16 %v94
    %v227 = vunpack.c.l.b16 %v95
    %v228 = vunpack.c.l.b16 %v96
    %v229 = vunpack.c.l.b16 %v97
    %v230 = vunpack.c.l.b16 %v98
    %v231 = vunpack.c.l.b16 %v99
    %v232 = vunpack.c.l.b16 %v100
    %v233 = vunpack.c.l.b16 %v101
    %v234 = vunpack.c.l.b16 %v102
    %v235 = vunpack.c.l.b16 %v103
    %v236 = vunpack.c.l.b16 %v104
    %v237 = vunpack.c.l.b16 %v105
    %v238 = vunpack.c.l.b16 %v106
    %v239 = vunpack.c.l.b16 %v107
    %v240 = vunpack.c.l.b16 %v108
    %v241 = vunpack.c.l.b16 %v109
    %v242 = vunpack.c.l.b16 %v110
    %v243 = vunpack.c.l.b16 %v111
    %v244 = vunpack.c.l.b16 %v112
    %v245 = vunpack.c.l.b16 %v113
    %v246 = vunpack.c.l.b16 %v114
    %v247 = vunpack.c.l.b16 %v115
    %v248 = vunpack.c.l.b16 %v116
    %v249 = vunpack.c.l.b16 %v117
    %v250 = vunpack.c.l.b16 %v118
    %v251 = vunpack.c.l.b16 %v119
    %v252 = vunpack.c.l.b16 %v120
    %v253 = vunpack.c.l.b16 %v121
    %v254 = vunpack.c.l.b16 %v122
    %v255 = vunpack.c.l.b16 %v123
    %v256 = vpack.c.b16 %v193, %v192
    %v257 = vpack.c.b16 %v195, %v194
    %v258 = vpack.c.b16 %v197, %v196
    %v259 = vpack.c.b16 %v199, %v198
    %v260 = vpack.c.b16 %v201, %v200
    %v261 = vpack.c.b16 %v203, %v202
    %v262 = vpack.c.b16 %v205, %v204
    %v263 = vpack.c.b16 %v207, %v206
    %v264 = vpack.c.b16 %v209, %v208
    %v265 = vpack.c.b16 %v211, %v210
    %v266 = vpack.c.b16 %v213, %v212
    %v267 = vpack.c.b16 %v215, %v214
    %v268 = vpack.c.b16 %v217, %v216
    %v269 = vpack.c.b16 %v219, %v218
    %v270 = vpack.c.b16 %v221, %v220
    %v271 = vpack.c.b16 %v223, %v222
    %v272 = vpack.c.b16 %v225, %v224
    %v273 = vpack.c.b16 %v227, %v226
    %v274 = vpack.c.b16 %v229, %v228
    %v275 = vpack.c.b16 %v231, %v230
    %v276 = vpack.c.b16 %v233, %v232
    %v277 = vpack.c.b16 %v235, %v234
    %v278 = vpack.c.b16 %v237, %v236
    %v279 = vpack.c.b16 %v239, %v238
    %v280 = vpack.c.b16 %v241, %v240
    %v281 = vpack.c.b16 %v243, %v242
    %v282 = vpack.c.b16 %v245, %v244
    %v283 = vpack.c.b16 %v247, %v246
    %v284 = vpack.c.b16 %v249, %v248
    %v285 = vpack.c.b16 %v251, %v250
    %v286 = vpack.c.b16 %v253, %v252
    %v287 = vpack.c.b16 %v255, %v254
    %320 = vmatpush.bf16.msra.mxu0 %v263
    %321 = vmatpush.bf16.msra.mxu0 %v262
    %322 = vmatpush.bf16.msra.mxu0 %v261
    %323 = vmatpush.bf16.msra.mxu0 %v260
    %324 = vmatpush.bf16.msra.mxu0 %v259
    %325 = vmatpush.bf16.msra.mxu0 %v258
    %326 = vmatpush.bf16.msra.mxu0 %v257
    %327 = vmatpush.bf16.msra.mxu0 %v256
    %328 = vmatmul.bf16.gmra.mxu0 %v56
    %v329 = vpop.f32.mrf.mxu0
    %v330 = vadd.f32 %v126, %v329
    %v331 = vpop.f32.mrf.mxu0
    %332 = vdwg.mxu0
    %333 = vmatpush.bf16.msra.mxu0 %v271
    %334 = vmatpush.bf16.msra.mxu0 %v270
    %335 = vmatpush.bf16.msra.mxu0 %v269
    %336 = vmatpush.bf16.msra.mxu0 %v268
    %337 = vmatpush.bf16.msra.mxu0 %v267
    %338 = vmatpush.bf16.msra.mxu0 %v266
    %339 = vmatpush.bf16.msra.mxu0 %v265
    %340 = vmatpush.bf16.msra.mxu0 %v264
    %341 = vmatmul.bf16.gmra.mxu0 %v57
    %v342 = vpop.f32.mrf.mxu0
    %v343 = vadd.f32 %v330, %v342
    %v344 = vpop.f32.mrf.mxu0
    %345 = vdwg.mxu0
    %346 = vmatpush.bf16.msra.mxu0 %v279
    %347 = vmatpush.bf16.msra.mxu0 %v278
    %348 = vmatpush.bf16.msra.mxu0 %v277
    %349 = vmatpush.bf16.msra.mxu0 %v276
    %350 = vmatpush.bf16.msra.mxu0 %v275
    %351 = vmatpush.bf16.msra.mxu0 %v274
    %352 = vmatpush.bf16.msra.mxu0 %v273
    %353 = vmatpush.bf16.msra.mxu0 %v272
    %354 = vmatmul.bf16.gmra.mxu0 %v58
    %v355 = vpop.f32.mrf.mxu0
    %v356 = vadd.f32 %v343, %v355
    %v357 = vpop.f32.mrf.mxu0
    %358 = vdwg.mxu0
    %359 = vmatpush.bf16.msra.mxu0 %v287
    %360 = vmatpush.bf16.msra.mxu0 %v286
    %361 = vmatpush.bf16.msra.mxu0 %v285
    %362 = vmatpush.bf16.msra.mxu0 %v284
    %363 = vmatpush.bf16.msra.mxu0 %v283
    %364 = vmatpush.bf16.msra.mxu0 %v282
    %365 = vmatpush.bf16.msra.mxu0 %v281
    %366 = vmatpush.bf16.msra.mxu0 %v280
    %367 = vmatmul.bf16.gmra.mxu0 %v59
    %v368 = vpop.f32.mrf.mxu0
    %v369 = vadd.f32 %v356, %v368
    %v370 = vpop.f32.mrf.mxu0
    %371 = vdwg.mxu0
    %372 = vst [vmem:[#allocation7] sm:$0x3] %v369
    // Predicated region
    $region22: #{tpu_custom_call.1} parent=1 // pred_check
      _
    $region23: #{tpu_custom_call.1} parent=1 // pred_check_branch
      %374 = sbr.rel (0) target = $region25
    $region24: #{tpu_custom_call.1} parent=1 // pred_region
      %376 = vsyncadd [#allocation4], 0
      %s378 = sshll.u32 [#allocation7], 4
      %s379 = int_to_ptr.vmem [resolvable:$true] %s378
      %s380 = sshll.u32 %s3, 4
      %s381 = int_to_ptr.hbm [resolvable:$true] %s380
      %383 = dma.vmem_to_hbm [thread:$0]  %s379, 32, %s381, [#allocation4]
    $region25: #{tpu_custom_call.1} parent=1 // pred_fallthru
      _
    // Predicated region
    $region26: #{tpu_custom_call.1} parent=1 // pred_check
      _
    $region27: #{tpu_custom_call.1} parent=1 // pred_check_branch
      %385 = sbr.rel (0) target = $region29
    $region28: #{tpu_custom_call.1} parent=1 // pred_region
      %387 = dma.done [#allocation4], 32
    $region29: #{tpu_custom_call.1} parent=1 // pred_fallthru
      _
    %388 = vsyncpa [#allocation3], 1
    %389 = vsyncpa [#allocation6], 1
    %390 = vsyncpa [#allocation4], 1

</llo_original>
